<compile_context>
chip_gen: v7x
topology: tpu7x:2x2x1
jax: 0.10.0
libtpu: 0.0.40
codegen_flags: <defaults>
</compile_context>

<pallas_src>
import functools

import jax
import jax.numpy as jnp
from jax.experimental import pallas as pl
from jax.experimental.pallas import tpu as pltpu

NEG_SLOPE = 0.01  # F.leaky_relu default negative_slope


def _round_up(x, m):
    return ((x + m - 1) // m) * m


def _leaky_relu(x):
    return jnp.where(x > 0, x, NEG_SLOPE * x)


# --------------------------------------------------------------------------
# Kernel: one batch tile of the full head, everything resident in VMEM.
# --------------------------------------------------------------------------
def head_kernel(x_ref, w1_ref, b1_ref, w2_ref, b2_ref, w3_ref, b3_ref, o_ref):
    x = x_ref[...]                                             # bf16 [tb, 1000]
    h = jnp.dot(x, w1_ref[...], preferred_element_type=jnp.float32) + b1_ref[...]
    h = _leaky_relu(h)
    # dropout1: identity at inference (eval mode)
    h = jnp.dot(h.astype(w2_ref.dtype), w2_ref[...],
                preferred_element_type=jnp.float32) + b2_ref[...]
    h = _leaky_relu(h)
    # dropout2: identity at inference (eval mode)
    h = jnp.dot(h.astype(w3_ref.dtype), w3_ref[...],
                preferred_element_type=jnp.float32) + b3_ref[...]
    h = _leaky_relu(h)
    o_ref[...] = jax.nn.sigmoid(h).astype(o_ref.dtype)


# --------------------------------------------------------------------------
# One-time parameter preparation (model-load time, NOT per call).
# --------------------------------------------------------------------------
def prepare_head_params(w1, b1, w2, b2, w3, b3, *, compute_dtype=jnp.bfloat16):
    """Pads/casts the head parameters once. Returns (params, num_classes)."""
    F, H1 = w1.shape
    H2 = w2.shape[1]
    C = w3.shape[1]

    H2p = _round_up(H2, 128)          # 32 -> 128: lane-dense fc2 activations
    Cp = _round_up(max(C, 128), 128)  # 2 -> 128: lane-dense output stores

    # Zero-padding is mathematically inert: padded fc2 units get bias 0 ->
    # activation 0 -> leaky_relu 0, and the matching W3 rows are zero; padded
    # output classes are sliced off by the wrapper.
    w1c = w1.astype(compute_dtype)                                   # (1000,128)
    b1r = b1.reshape(1, H1).astype(jnp.float32)
    w2p = jnp.pad(w2, ((0, 0), (0, H2p - H2))).astype(compute_dtype)  # (128,128)
    b2p = jnp.pad(b2, ((0, H2p - H2),)).reshape(1, H2p).astype(jnp.float32)
    w3p = jnp.pad(w3, ((0, H2p - H2), (0, Cp - C))).astype(compute_dtype)
    b3p = jnp.pad(b3, ((0, Cp - C),)).reshape(1, Cp).astype(jnp.float32)

    params = (w1c, b1r, w2p, b2p, w3p, b3p)
    return params, C


def _choose_tile_b(B):
    """Large batch tiles amortize per-step overhead and fill the MXU; cap at
    512 rows (bf16 feats tile double-buffered ~2 MiB, well under the 16/32 MiB
    scoped VMEM defaults of v5e/v6e/v7x). Prefer >=2 grid steps so v7x's two
    TensorCores both get work on the 'parallel' batch axis."""
    b8 = _round_up(B, 8)
    if b8 >= 1024:
        return 512
    if b8 >= 16:
        return _round_up((b8 + 1) // 2, 8)
    return b8


# --------------------------------------------------------------------------
# Wrapper.
# --------------------------------------------------------------------------
def creative_net_head(feats, params, num_classes, *, tile_b=None):
    """feats: [B, 1000] (output of the frozen mobilenet_v3_small backbone)."""
    w1, b1, w2, b2, w3, b3 = params
    B, F = feats.shape
    H1 = w1.shape[1]
    H2p = w2.shape[1]
    Cp = w3.shape[1]

    if tile_b is None:
        tile_b = _choose_tile_b(B)
    B_pad = _round_up(B, tile_b)
    if B_pad != B:
        # Row padding only when B is not a tile multiple (cheap, rare).
        feats = jnp.pad(feats, ((0, B_pad - B), (0, 0)))
    # bf16 matmul inputs halve the dominant feature DMA; math stays f32.
    feats = feats.astype(w1.dtype)

    grid = (B_pad // tile_b,)

    itemsize = jnp.dtype(w1.dtype).itemsize
    flops = 2 * B_pad * (F * H1 + H1 * H2p + H2p * Cp)
    bytes_accessed = (B_pad * F * itemsize                       # feats in
                      + B_pad * Cp * 4                           # out
                      + (F * H1 + H1 * H2p + H2p * Cp) * itemsize
                      + (H1 + H2p + Cp) * 4)                     # biases
    cost = pl.CostEstimate(flops=flops,
                           transcendentals=B_pad * Cp,           # sigmoid exp
                           bytes_accessed=bytes_accessed)

    out = pl.pallas_call(
        head_kernel,
        out_shape=jax.ShapeDtypeStruct((B_pad, Cp), jnp.float32),
        grid_spec=pltpu.PrefetchScalarGridSpec(
            num_scalar_prefetch=0,
            grid=grid,
            in_specs=[
                # feats: last block dim == full array dim (1000) -> no host pad.
                pl.BlockSpec((tile_b, F), lambda i: (i, 0)),
                pl.BlockSpec((F, H1), lambda i: (0, 0)),    # W1 (1000,128), resident
                pl.BlockSpec((1, H1), lambda i: (0, 0)),    # b1
                pl.BlockSpec((H1, H2p), lambda i: (0, 0)),  # W2 (128,128)
                pl.BlockSpec((1, H2p), lambda i: (0, 0)),   # b2
                pl.BlockSpec((H2p, Cp), lambda i: (0, 0)),  # W3 (128,128)
                pl.BlockSpec((1, Cp), lambda i: (0, 0)),    # b3
            ],
            out_specs=pl.BlockSpec((tile_b, Cp), lambda i: (i, 0)),
        ),
        compiler_params=pltpu.CompilerParams(
            dimension_semantics=("parallel",)),
        cost_estimate=cost,
    )(feats, w1, b1, w2, b2, w3, b3)

    return out[:B, :num_classes]


# --------------------------------------------------------------------------
# Pure-JAX f32 reference for the head.
# --------------------------------------------------------------------------
def _reference(feats, w1, b1, w2, b2, w3, b3):
    h = _leaky_relu(feats @ w1 + b1)
    h = _leaky_relu(h @ w2 + b2)
    h = _leaky_relu(h @ w3 + b3)
    return jax.nn.sigmoid(h)


if __name__ == "__main__":
    B, F, H1, H2, C = 8, 1000, 128, 32, 2

    key = jax.random.PRNGKey(0)
    kx, k1, k2, k3, kb1, kb2, kb3, kx2 = jax.random.split(key, 8)

    feats = jax.random.normal(kx, (B, F), dtype=jnp.float32)

    # Deterministic parameter init (Linear-layer shapes from __init__).
    w1 = jax.random.normal(k1, (F, H1), dtype=jnp.float32) * 0.02
    b1 = jax.random.normal(kb1, (H1,), dtype=jnp.float32) * 0.02
    w2 = jax.random.normal(k2, (H1, H2), dtype=jnp.float32) * 0.05
    b2 = jax.random.normal(kb2, (H2,), dtype=jnp.float32) * 0.05
    w3 = jax.random.normal(k3, (H2, C), dtype=jnp.float32) * 0.1
    b3 = jax.random.normal(kb3, (C,), dtype=jnp.float32) * 0.1

    # Parameters are padded/cast ONCE (model-load time), outside the call path.
    params, n_classes = prepare_head_params(w1, b1, w2, b2, w3, b3)

    run = functools.partial(creative_net_head, params=params,
                            num_classes=n_classes)

    # Small batch (single grid step).
    out = jax.block_until_ready(run(feats))
    ref = _reference(feats, w1, b1, w2, b2, w3, b3)
    assert out.shape == (B, C), out.shape
    assert jnp.allclose(out, ref, atol=2e-2, rtol=2e-2), "mismatch vs reference"

    # Non-multiple batch exercises auto tile selection + row padding + 2-step grid.
    B2 = 40
    feats2 = jax.random.normal(kx2, (B2, F), dtype=jnp.float32)
    out2 = jax.block_until_ready(run(feats2))
    ref2 = _reference(feats2, w1, b1, w2, b2, w3, b3)
    assert out2.shape == (B2, C), out2.shape
    assert jnp.allclose(out2, ref2, atol=2e-2, rtol=2e-2), "mismatch vs reference (B=40)"

    print("KERNEL_OK")
</pallas_src>

<mosaic_0001>
module attributes {stable_mosaic.version = 11 : i64} {
  func.func @head_kernel(%arg0: i32, %arg1: memref<8x1000xbf16, #tpu.memory_space<vmem>>, %arg2: memref<1000x128xbf16, #tpu.memory_space<vmem>>, %arg3: memref<1x128xf32, #tpu.memory_space<vmem>>, %arg4: memref<128x128xbf16, #tpu.memory_space<vmem>>, %arg5: memref<1x128xf32, #tpu.memory_space<vmem>>, %arg6: memref<128x128xbf16, #tpu.memory_space<vmem>>, %arg7: memref<1x128xf32, #tpu.memory_space<vmem>>, %arg8: memref<8x128xf32, #tpu.memory_space<vmem>>) attributes {dimension_semantics = [#tpu.dimension_semantics<parallel>], iteration_bounds = array<i64: 1>, scalar_prefetch = 0 : i64, scratch_operands = 0 : i64, tpu.core_type = #tpu.core_type<tc>, window_params = [{transform_indices = @transform_0, window_bounds = array<i64: 8, 1000>}, {pipeline_mode = #tpu.pipeline_mode<synchronous>, transform_indices = @transform_1, window_bounds = array<i64: 1000, 128>}, {pipeline_mode = #tpu.pipeline_mode<synchronous>, transform_indices = @transform_2, window_bounds = array<i64: 1, 128>}, {pipeline_mode = #tpu.pipeline_mode<synchronous>, transform_indices = @transform_3, window_bounds = array<i64: 128, 128>}, {pipeline_mode = #tpu.pipeline_mode<synchronous>, transform_indices = @transform_4, window_bounds = array<i64: 1, 128>}, {pipeline_mode = #tpu.pipeline_mode<synchronous>, transform_indices = @transform_5, window_bounds = array<i64: 128, 128>}, {pipeline_mode = #tpu.pipeline_mode<synchronous>, transform_indices = @transform_6, window_bounds = array<i64: 1, 128>}, {transform_indices = @transform_7, window_bounds = array<i64: 8, 128>}]} {
    %c0 = arith.constant 0 : index
    %c0_0 = arith.constant 0 : index
    %0 = vector.load %arg1[%c0, %c0_0] : memref<8x1000xbf16, #tpu.memory_space<vmem>>, vector<8x1000xbf16>
    %c0_1 = arith.constant 0 : index
    %c0_2 = arith.constant 0 : index
    %1 = vector.load %arg2[%c0_1, %c0_2] : memref<1000x128xbf16, #tpu.memory_space<vmem>>, vector<1000x128xbf16>
    %cst = arith.constant dense<0.000000e+00> : vector<8x128xf32>
    %2 = tpu.matmul %0, %1, %cst {dimension_numbers = #tpu.dot_dimension_numbers<[1], [0], [0], [1], [0, 0, 1, 1], [], []>} : vector<8x1000xbf16>, vector<1000x128xbf16>, vector<8x128xf32> -> vector<8x128xf32>
    %c0_3 = arith.constant 0 : index
    %c0_4 = arith.constant 0 : index
    %3 = vector.load %arg3[%c0_3, %c0_4] : memref<1x128xf32, #tpu.memory_space<vmem>>, vector<1x128xf32>
    %4 = vector.broadcast %3 : vector<1x128xf32> to vector<8x128xf32>
    %5 = arith.addf %2, %4 : vector<8x128xf32>
    %cst_5 = arith.constant 0.000000e+00 : f32
    %6 = vector.broadcast %cst_5 : f32 to vector<8x128xf32>
    %7 = arith.cmpf ogt, %5, %6 : vector<8x128xf32>
    %cst_6 = arith.constant 0.00999999977 : f32
    %8 = vector.broadcast %cst_6 : f32 to vector<8x128xf32>
    %9 = arith.mulf %8, %5 : vector<8x128xf32>
    %10 = arith.select %7, %5, %9 : vector<8x128xi1>, vector<8x128xf32>
    %11 = arith.truncf %10 : vector<8x128xf32> to vector<8x128xbf16>
    %c0_7 = arith.constant 0 : index
    %c0_8 = arith.constant 0 : index
    %12 = vector.load %arg4[%c0_7, %c0_8] : memref<128x128xbf16, #tpu.memory_space<vmem>>, vector<128x128xbf16>
    %cst_9 = arith.constant dense<0.000000e+00> : vector<8x128xf32>
    %13 = tpu.matmul %11, %12, %cst_9 {dimension_numbers = #tpu.dot_dimension_numbers<[1], [0], [0], [1], [0, 0, 1, 1], [], []>} : vector<8x128xbf16>, vector<128x128xbf16>, vector<8x128xf32> -> vector<8x128xf32>
    %c0_10 = arith.constant 0 : index
    %c0_11 = arith.constant 0 : index
    %14 = vector.load %arg5[%c0_10, %c0_11] : memref<1x128xf32, #tpu.memory_space<vmem>>, vector<1x128xf32>
    %15 = vector.broadcast %14 : vector<1x128xf32> to vector<8x128xf32>
    %16 = arith.addf %13, %15 : vector<8x128xf32>
    %cst_12 = arith.constant 0.000000e+00 : f32
    %17 = vector.broadcast %cst_12 : f32 to vector<8x128xf32>
    %18 = arith.cmpf ogt, %16, %17 : vector<8x128xf32>
    %cst_13 = arith.constant 0.00999999977 : f32
    %19 = vector.broadcast %cst_13 : f32 to vector<8x128xf32>
    %20 = arith.mulf %19, %16 : vector<8x128xf32>
    %21 = arith.select %18, %16, %20 : vector<8x128xi1>, vector<8x128xf32>
    %22 = arith.truncf %21 : vector<8x128xf32> to vector<8x128xbf16>
    %c0_14 = arith.constant 0 : index
    %c0_15 = arith.constant 0 : index
    %23 = vector.load %arg6[%c0_14, %c0_15] : memref<128x128xbf16, #tpu.memory_space<vmem>>, vector<128x128xbf16>
    %cst_16 = arith.constant dense<0.000000e+00> : vector<8x128xf32>
    %24 = tpu.matmul %22, %23, %cst_16 {dimension_numbers = #tpu.dot_dimension_numbers<[1], [0], [0], [1], [0, 0, 1, 1], [], []>} : vector<8x128xbf16>, vector<128x128xbf16>, vector<8x128xf32> -> vector<8x128xf32>
    %c0_17 = arith.constant 0 : index
    %c0_18 = arith.constant 0 : index
    %25 = vector.load %arg7[%c0_17, %c0_18] : memref<1x128xf32, #tpu.memory_space<vmem>>, vector<1x128xf32>
    %26 = vector.broadcast %25 : vector<1x128xf32> to vector<8x128xf32>
    %27 = arith.addf %24, %26 : vector<8x128xf32>
    %cst_19 = arith.constant 0.000000e+00 : f32
    %28 = vector.broadcast %cst_19 : f32 to vector<8x128xf32>
    %29 = arith.cmpf ogt, %27, %28 : vector<8x128xf32>
    %cst_20 = arith.constant 0.00999999977 : f32
    %30 = vector.broadcast %cst_20 : f32 to vector<8x128xf32>
    %31 = arith.mulf %30, %27 : vector<8x128xf32>
    %32 = arith.select %29, %27, %31 : vector<8x128xi1>, vector<8x128xf32>
    %33 = arith.negf %32 : vector<8x128xf32>
    %34 = math.exp %33 : vector<8x128xf32>
    %cst_21 = arith.constant 1.000000e+00 : f32
    %35 = vector.broadcast %cst_21 : f32 to vector<8x128xf32>
    %36 = arith.addf %35, %34 : vector<8x128xf32>
    %37 = arith.divf %35, %36 : vector<8x128xf32>
    %c0_22 = arith.constant 0 : index
    %c0_23 = arith.constant 0 : index
    %38 = vector.load %arg8[%c0_22, %c0_23] : memref<8x128xf32, #tpu.memory_space<vmem>>, vector<8x128xf32>
    tpu.vector_store %arg8[%c0_22, %c0_23], %37 {strides = array<i32>} : memref<8x128xf32, #tpu.memory_space<vmem>>, vector<8x128xf32>,
    return
  }
  func.func @transform_0(%arg0: i32) -> (i32, i32) {
    %c0_i32 = arith.constant 0 : i32
    %c0_i32_0 = arith.constant 0 : i32
    return %arg0, %c0_i32 : i32, i32
  }
  func.func @transform_1(%arg0: i32) -> (i32, i32) {
    %c0_i32 = arith.constant 0 : i32
    %c0_i32_0 = arith.constant 0 : i32
    %c0_i32_1 = arith.constant 0 : i32
    return %c0_i32, %c0_i32_0 : i32, i32
  }
  func.func @transform_2(%arg0: i32) -> (i32, i32) {
    %c0_i32 = arith.constant 0 : i32
    %c0_i32_0 = arith.constant 0 : i32
    %c0_i32_1 = arith.constant 0 : i32
    return %c0_i32, %c0_i32_0 : i32, i32
  }
  func.func @transform_3(%arg0: i32) -> (i32, i32) {
    %c0_i32 = arith.constant 0 : i32
    %c0_i32_0 = arith.constant 0 : i32
    %c0_i32_1 = arith.constant 0 : i32
    return %c0_i32, %c0_i32_0 : i32, i32
  }
  func.func @transform_4(%arg0: i32) -> (i32, i32) {
    %c0_i32 = arith.constant 0 : i32
    %c0_i32_0 = arith.constant 0 : i32
    %c0_i32_1 = arith.constant 0 : i32
    return %c0_i32, %c0_i32_0 : i32, i32
  }
  func.func @transform_5(%arg0: i32) -> (i32, i32) {
    %c0_i32 = arith.constant 0 : i32
    %c0_i32_0 = arith.constant 0 : i32
    %c0_i32_1 = arith.constant 0 : i32
    return %c0_i32, %c0_i32_0 : i32, i32
  }
  func.func @transform_6(%arg0: i32) -> (i32, i32) {
    %c0_i32 = arith.constant 0 : i32
    %c0_i32_0 = arith.constant 0 : i32
    %c0_i32_1 = arith.constant 0 : i32
    return %c0_i32, %c0_i32_0 : i32, i32
  }
  func.func @transform_7(%arg0: i32) -> (i32, i32) {
    %c0_i32 = arith.constant 0 : i32
    %c0_i32_0 = arith.constant 0 : i32
    return %arg0, %c0_i32 : i32, i32
  }
}

</mosaic_0001>

<llo_original>
// kernel: tpu_custom_call.1
$region0: #{tpu_custom_call.1}
  #allocation0 [shape = 'u32[]', space=smem, size = 0x4, offset = 0x4, fixed_abs, tag = 'smem constant byte address 0x4 - core index']
  #allocation1 [shape = 'u32[144,128]{1,0:T(1,128)}', space=vmem, size = 0x12000, scoped, tag = 'internal scratch']
  %s0 = inlined_call_operand.hbm [shape: bf16[8,1000], index: 0, kind: input, shape index: {}]
  %s1 = inlined_call_operand.hbm [shape: bf16[1000,128], index: 1, kind: input, shape index: {}]
  %s2 = inlined_call_operand.vmem [shape: f32[1,128], index: 2, kind: input, shape index: {}]
  %s3 = inlined_call_operand.hbm [shape: bf16[128,128], index: 3, kind: input, shape index: {}]
  %s4 = inlined_call_operand.vmem [shape: f32[1,128], index: 4, kind: input, shape index: {}]
  %s5 = inlined_call_operand.hbm [shape: bf16[128,128], index: 5, kind: input, shape index: {}]
  %s6 = inlined_call_operand.vmem [shape: f32[1,128], index: 6, kind: input, shape index: {}]
  %s7 = inlined_call_operand.hbm [shape: f32[8,128], index: 7, kind: output, shape index: {}]
  %s8 = sld [smem:[#allocation0]]
  $region54: #{tpu_custom_call.1} parent=0
    _
  %s10 = ssub.s32 1, %s8
  %s11 = scalar_select 0, %s10, %s8
  $region1: #{tpu_custom_call.1} parent=0
    #allocation2 [shape = 'u8[16384]{0}', space=vmem, size = 0x4000, scoped, tag = 'input window, operand 0, single buffered']
    #allocation3 [shape = 's32[1]{0}', space=sflag, size = 0x4, scoped, tag = 'scoped memory for tpu_custom_call.1']
    #allocation4 [shape = 's32[1]{0}', space=sflag, size = 0x4, scoped, tag = 'scoped memory for tpu_custom_call.1']
    #allocation5 [shape = 'u8[256000]{0}', space=vmem, size = 0x3e800, scoped, tag = 'input window, operand 1, single buffered']
    #allocation6 [shape = 's32[1]{0}', space=sflag, size = 0x4, scoped, tag = 'scoped memory for tpu_custom_call.1']
    #allocation7 [shape = 'u8[32768]{0}', space=vmem, size = 0x8000, scoped, tag = 'input window, operand 3, single buffered']
    #allocation8 [shape = 'u8[32768]{0}', space=vmem, size = 0x8000, scoped, tag = 'input window, operand 5, single buffered']
    #allocation9 [shape = 's32[1]{0}', space=sflag, size = 0x4, scoped, tag = 'scoped memory for tpu_custom_call.1']
    #allocation10 [shape = 'u8[4096]{0}', space=vmem, size = 0x1000, scoped, tag = 'output window, operand 0, single buffered']
    %12 = vsyncpa [#allocation3], 0
    %13 = vsyncpa [#allocation6], 0
    %14 = vsyncpa [#allocation9], 0
    %15 = vsyncpa [#allocation4], 0
    // Predicated region
    $region2: #{tpu_custom_call.1} parent=1 // pred_check
      _
    $region3: #{tpu_custom_call.1} parent=1 // pred_check_branch
      %17 = sbr.rel (0) target = $region5
    $region4: #{tpu_custom_call.1} parent=1 // pred_region
      %s19 = ssub.s32 512, 512
      %20 = vsyncadd [#allocation3], %s19
      %s22 = sshll.u32 [#allocation2], 4
      %s23 = int_to_ptr.vmem [resolvable:$true] %s22
      %25 = dma.hbm_to_vmem [thread:$0]  %s0, 512, %s23, [#allocation3]
    $region5: #{tpu_custom_call.1} parent=1 // pred_fallthru
      _
    // Predicated region
    $region6: #{tpu_custom_call.1} parent=1 // pred_check
      _
    $region7: #{tpu_custom_call.1} parent=1 // pred_check_branch
      %27 = sbr.rel (0) target = $region9
    $region8: #{tpu_custom_call.1} parent=1 // pred_region
      %s29 = ssub.s32 8000, 8000
      %30 = vsyncadd [#allocation6], %s29
      %s31 = sshll.u32 [#allocation5], 4
      %s32 = int_to_ptr.vmem [resolvable:$true] %s31
      %37 = dma.hbm_to_vmem [thread:$0]  %s1, 8000, %s32, [#allocation6], 64, 64, 4
    $region9: #{tpu_custom_call.1} parent=1 // pred_fallthru
      _
    // Predicated region
    $region10: #{tpu_custom_call.1} parent=1 // pred_check
      _
    $region11: #{tpu_custom_call.1} parent=1 // pred_check_branch
      %39 = sbr.rel (0) target = $region13
    $region12: #{tpu_custom_call.1} parent=1 // pred_region
      _
    $region13: #{tpu_custom_call.1} parent=1 // pred_fallthru
      _
    // Predicated region
    $region14: #{tpu_custom_call.1} parent=1 // pred_check
      _
    $region15: #{tpu_custom_call.1} parent=1 // pred_check_branch
      %41 = sbr.rel (0) target = $region17
    $region16: #{tpu_custom_call.1} parent=1 // pred_region
      %s43 = ssub.s32 1024, 1024
      %44 = vsyncadd [#allocation6], %s43
      %s45 = sshll.u32 [#allocation7], 4
      %s46 = int_to_ptr.vmem [resolvable:$true] %s45
      %51 = dma.hbm_to_vmem [thread:$0]  %s3, 1024, %s46, [#allocation6], 64, 64, 4
    $region17: #{tpu_custom_call.1} parent=1 // pred_fallthru
      _
    // Predicated region
    $region18: #{tpu_custom_call.1} parent=1 // pred_check
      _
    $region19: #{tpu_custom_call.1} parent=1 // pred_check_branch
      %53 = sbr.rel (0) target = $region21
    $region20: #{tpu_custom_call.1} parent=1 // pred_region
      _
    $region21: #{tpu_custom_call.1} parent=1 // pred_fallthru
      _
    // Predicated region
    $region22: #{tpu_custom_call.1} parent=1 // pred_check
      _
    $region23: #{tpu_custom_call.1} parent=1 // pred_check_branch
      %55 = sbr.rel (0) target = $region25
    $region24: #{tpu_custom_call.1} parent=1 // pred_region
      %s57 = ssub.s32 1024, 1024
      %58 = vsyncadd [#allocation9], %s57
      %s59 = sshll.u32 [#allocation8], 4
      %s60 = int_to_ptr.vmem [resolvable:$true] %s59
      %65 = dma.hbm_to_vmem [thread:$0]  %s5, 1024, %s60, [#allocation9], 64, 64, 4
    $region25: #{tpu_custom_call.1} parent=1 // pred_fallthru
      _
    // Predicated region
    $region26: #{tpu_custom_call.1} parent=1 // pred_check
      _
    $region27: #{tpu_custom_call.1} parent=1 // pred_check_branch
      %67 = sbr.rel (0) target = $region29
    $region28: #{tpu_custom_call.1} parent=1 // pred_region
      _
    $region29: #{tpu_custom_call.1} parent=1 // pred_fallthru
      _
    // Predicated region
    $region30: #{tpu_custom_call.1} parent=1 // pred_check
      _
    $region31: #{tpu_custom_call.1} parent=1 // pred_check_branch
      %69 = sbr.rel (0) target = $region33
    $region32: #{tpu_custom_call.1} parent=1 // pred_region
      %70 = dma.done [#allocation3], 512
    $region33: #{tpu_custom_call.1} parent=1 // pred_fallthru
      _
    // Predicated region
    $region34: #{tpu_custom_call.1} parent=1 // pred_check
      _
    $region35: #{tpu_custom_call.1} parent=1 // pred_check_branch
      %72 = sbr.rel (0) target = $region37
    $region36: #{tpu_custom_call.1} parent=1 // pred_region
      %73 = dma.done [#allocation6], 8000
    $region37: #{tpu_custom_call.1} parent=1 // pred_fallthru
      _
    // Predicated region
    $region38: #{tpu_custom_call.1} parent=1 // pred_check
      _
    $region39: #{tpu_custom_call.1} parent=1 // pred_check_branch
      %75 = sbr.rel (0) target = $region41
    $region40: #{tpu_custom_call.1} parent=1 // pred_region
      %76 = dma.done [#allocation6], 1024
    $region41: #{tpu_custom_call.1} parent=1 // pred_fallthru
      _
    // Predicated region
    $region42: #{tpu_custom_call.1} parent=1 // pred_check
      _
    $region43: #{tpu_custom_call.1} parent=1 // pred_check_branch
      %78 = sbr.rel (0) target = $region45
    $region44: #{tpu_custom_call.1} parent=1 // pred_region
      %79 = dma.done [#allocation9], 1024
    $region45: #{tpu_custom_call.1} parent=1 // pred_fallthru
      _
    %v81 = vld [vmem:[#allocation2] sm:$0xff]
    %v82 = vld [vmem:[#allocation2 + $0x8] sm:$0xff]
    %v83 = vld [vmem:[#allocation2 + $0x10] sm:$0xff]
    %v84 = vld [vmem:[#allocation2 + $0x18] sm:$0xff]
    %v85 = vld [vmem:[#allocation5] sm:$0xf]
    %v86 = vld [vmem:[#allocation5 + $0x4] sm:$0xf]
    %v87 = vld [vmem:[#allocation5 + $0x8] sm:$0xf]
    %v88 = vld [vmem:[#allocation5 + $0xc] sm:$0xf]
    %v89 = vld [vmem:[#allocation5 + $0x10] sm:$0xf]
    %v90 = vld [vmem:[#allocation5 + $0x14] sm:$0xf]
    %v91 = vld [vmem:[#allocation5 + $0x18] sm:$0xf]
    %v92 = vld [vmem:[#allocation5 + $0x1c] sm:$0xf]
    %v93 = vld [vmem:[#allocation5 + $0x20] sm:$0xf]
    %v94 = vld [vmem:[#allocation5 + $0x24] sm:$0xf]
    %v95 = vld [vmem:[#allocation5 + $0x28] sm:$0xf]
    %v96 = vld [vmem:[#allocation5 + $0x2c] sm:$0xf]
    %v97 = vld [vmem:[#allocation5 + $0x30] sm:$0xf]
    %v98 = vld [vmem:[#allocation5 + $0x34] sm:$0xf]
    %v99 = vld [vmem:[#allocation5 + $0x38] sm:$0xf]
    %v100 = vld [vmem:[#allocation5 + $0x3c] sm:$0xf]
    %v101 = vld [vmem:[#allocation5 + $0x40] sm:$0xf]
    %v102 = vld [vmem:[#allocation5 + $0x44] sm:$0xf]
    %v103 = vld [vmem:[#allocation5 + $0x48] sm:$0xf]
    %v104 = vld [vmem:[#allocation5 + $0x4c] sm:$0xf]
    %v105 = vld [vmem:[#allocation5 + $0x50] sm:$0xf]
    %v106 = vld [vmem:[#allocation5 + $0x54] sm:$0xf]
    %v107 = vld [vmem:[#allocation5 + $0x58] sm:$0xf]
    %v108 = vld [vmem:[#allocation5 + $0x5c] sm:$0xf]
    %v109 = vld [vmem:[#allocation5 + $0x60] sm:$0xf]
    %v110 = vld [vmem:[#allocation5 + $0x64] sm:$0xf]
    %v111 = vld [vmem:[#allocation5 + $0x68] sm:$0xf]
    %v112 = vld [vmem:[#allocation5 + $0x6c] sm:$0xf]
    %v113 = vld [vmem:[#allocation5 + $0x70] sm:$0xf]
    %v114 = vld [vmem:[#allocation5 + $0x74] sm:$0xf]
    %v115 = vld [vmem:[#allocation5 + $0x78] sm:$0xf]
    %v116 = vld [vmem:[#allocation5 + $0x7c] sm:$0xf]
    %v117 = vld [vmem:[#allocation5 + $0x80] sm:$0xf]
    %v118 = vld [vmem:[#allocation5 + $0x84] sm:$0xf]
    %v119 = vld [vmem:[#allocation5 + $0x88] sm:$0xf]
    %v120 = vld [vmem:[#allocation5 + $0x8c] sm:$0xf]
    %v121 = vld [vmem:[#allocation5 + $0x90] sm:$0xf]
    %v122 = vld [vmem:[#allocation5 + $0x94] sm:$0xf]
    %v123 = vld [vmem:[#allocation5 + $0x98] sm:$0xf]
    %v124 = vld [vmem:[#allocation5 + $0x9c] sm:$0xf]
    %v125 = vld [vmem:[#allocation5 + $0xa0] sm:$0xf]
    %v126 = vld [vmem:[#allocation5 + $0xa4] sm:$0xf]
    %v127 = vld [vmem:[#allocation5 + $0xa8] sm:$0xf]
    %v128 = vld [vmem:[#allocation5 + $0xac] sm:$0xf]
    %v129 = vld [vmem:[#allocation5 + $0xb0] sm:$0xf]
    %v130 = vld [vmem:[#allocation5 + $0xb4] sm:$0xf]
    %v131 = vld [vmem:[#allocation5 + $0xb8] sm:$0xf]
    %v132 = vld [vmem:[#allocation5 + $0xbc] sm:$0xf]
    %v133 = vld [vmem:[#allocation5 + $0xc0] sm:$0xf]
    %v134 = vld [vmem:[#allocation5 + $0xc4] sm:$0xf]
    %v135 = vld [vmem:[#allocation5 + $0xc8] sm:$0xf]
    %v136 = vld [vmem:[#allocation5 + $0xcc] sm:$0xf]
    %v137 = vld [vmem:[#allocation5 + $0xd0] sm:$0xf]
    %v138 = vld [vmem:[#allocation5 + $0xd4] sm:$0xf]
    %v139 = vld [vmem:[#allocation5 + $0xd8] sm:$0xf]
    %v140 = vld [vmem:[#allocation5 + $0xdc] sm:$0xf]
    %v141 = vld [vmem:[#allocation5 + $0xe0] sm:$0xf]
    %v142 = vld [vmem:[#allocation5 + $0xe4] sm:$0xf]
    %v143 = vld [vmem:[#allocation5 + $0xe8] sm:$0xf]
    %v144 = vld [vmem:[#allocation5 + $0xec] sm:$0xf]
    %v145 = vld [vmem:[#allocation5 + $0xf0] sm:$0xf]
    %v146 = vld [vmem:[#allocation5 + $0xf4] sm:$0xf]
    %v147 = vld [vmem:[#allocation5 + $0xf8] sm:$0xf]
    %v148 = vld [vmem:[#allocation5 + $0xfc] sm:$0xf]
    %v149 = vld [vmem:[#allocation5 + $0x100] sm:$0xf]
    %v150 = vld [vmem:[#allocation5 + $0x104] sm:$0xf]
    %v151 = vld [vmem:[#allocation5 + $0x108] sm:$0xf]
    %v152 = vld [vmem:[#allocation5 + $0x10c] sm:$0xf]
    %v153 = vld [vmem:[#allocation5 + $0x110] sm:$0xf]
    %v154 = vld [vmem:[#allocation5 + $0x114] sm:$0xf]
    %v155 = vld [vmem:[#allocation5 + $0x118] sm:$0xf]
    %v156 = vld [vmem:[#allocation5 + $0x11c] sm:$0xf]
    %v157 = vld [vmem:[#allocation5 + $0x120] sm:$0xf]
    %v158 = vld [vmem:[#allocation5 + $0x124] sm:$0xf]
    %v159 = vld [vmem:[#allocation5 + $0x128] sm:$0xf]
    %v160 = vld [vmem:[#allocation5 + $0x12c] sm:$0xf]
    %v161 = vld [vmem:[#allocation5 + $0x130] sm:$0xf]
    %v162 = vld [vmem:[#allocation5 + $0x134] sm:$0xf]
    %v163 = vld [vmem:[#allocation5 + $0x138] sm:$0xf]
    %v164 = vld [vmem:[#allocation5 + $0x13c] sm:$0xf]
    %v165 = vld [vmem:[#allocation5 + $0x140] sm:$0xf]
    %v166 = vld [vmem:[#allocation5 + $0x144] sm:$0xf]
    %v167 = vld [vmem:[#allocation5 + $0x148] sm:$0xf]
    %v168 = vld [vmem:[#allocation5 + $0x14c] sm:$0xf]
    %v169 = vld [vmem:[#allocation5 + $0x150] sm:$0xf]
    %v170 = vld [vmem:[#allocation5 + $0x154] sm:$0xf]
    %v171 = vld [vmem:[#allocation5 + $0x158] sm:$0xf]
    %v172 = vld [vmem:[#allocation5 + $0x15c] sm:$0xf]
    %v173 = vld [vmem:[#allocation5 + $0x160] sm:$0xf]
    %v174 = vld [vmem:[#allocation5 + $0x164] sm:$0xf]
    %v175 = vld [vmem:[#allocation5 + $0x168] sm:$0xf]
    %v176 = vld [vmem:[#allocation5 + $0x16c] sm:$0xf]
    %v177 = vld [vmem:[#allocation5 + $0x170] sm:$0xf]
    %v178 = vld [vmem:[#allocation5 + $0x174] sm:$0xf]
    %v179 = vld [vmem:[#allocation5 + $0x178] sm:$0xf]
    %v180 = vld [vmem:[#allocation5 + $0x17c] sm:$0xf]
    %v181 = vld [vmem:[#allocation5 + $0x180] sm:$0xf]
    %v182 = vld [vmem:[#allocation5 + $0x184] sm:$0xf]
    %v183 = vld [vmem:[#allocation5 + $0x188] sm:$0xf]
    %v184 = vld [vmem:[#allocation5 + $0x18c] sm:$0xf]
    %v185 = vld [vmem:[#allocation5 + $0x190] sm:$0xf]
    %v186 = vld [vmem:[#allocation5 + $0x194] sm:$0xf]
    %v187 = vld [vmem:[#allocation5 + $0x198] sm:$0xf]
    %v188 = vld [vmem:[#allocation5 + $0x19c] sm:$0xf]
    %v189 = vld [vmem:[#allocation5 + $0x1a0] sm:$0xf]
    %v190 = vld [vmem:[#allocation5 + $0x1a4] sm:$0xf]
    %v191 = vld [vmem:[#allocation5 + $0x1a8] sm:$0xf]
    %v192 = vld [vmem:[#allocation5 + $0x1ac] sm:$0xf]
    %v193 = vld [vmem:[#allocation5 + $0x1b0] sm:$0xf]
    %v194 = vld [vmem:[#allocation5 + $0x1b4] sm:$0xf]
    %v195 = vld [vmem:[#allocation5 + $0x1b8] sm:$0xf]
    %v196 = vld [vmem:[#allocation5 + $0x1bc] sm:$0xf]
    %v197 = vld [vmem:[#allocation5 + $0x1c0] sm:$0xf]
    %v198 = vld [vmem:[#allocation5 + $0x1c4] sm:$0xf]
    %v199 = vld [vmem:[#allocation5 + $0x1c8] sm:$0xf]
    %v200 = vld [vmem:[#allocation5 + $0x1cc] sm:$0xf]
    %v201 = vld [vmem:[#allocation5 + $0x1d0] sm:$0xf]
    %v202 = vld [vmem:[#allocation5 + $0x1d4] sm:$0xf]
    %v203 = vld [vmem:[#allocation5 + $0x1d8] sm:$0xf]
    %v204 = vld [vmem:[#allocation5 + $0x1dc] sm:$0xf]
    %v205 = vld [vmem:[#allocation5 + $0x1e0] sm:$0xf]
    %v206 = vld [vmem:[#allocation5 + $0x1e4] sm:$0xf]
    %v207 = vld [vmem:[#allocation5 + $0x1e8] sm:$0xf]
    %v208 = vld [vmem:[#allocation5 + $0x1ec] sm:$0xf]
    %v209 = vld [vmem:[#allocation5 + $0x1f0] sm:$0xf]
    %v210 = vld [vmem:[%s2] sm:$0x1]
    %v212 = vlaneseq
    %v213 = vshrl.u32 %v212, 7
    %v214 = vsub.s32 0, %v213
    %v215 = vrot.slane %v210, %v214
    %v221 = vunpack.c.l.b16 %v81
    %v222 = vunpack.c.h.b16 %v81
    %v223 = vunpack.c.l.b16 %v82
    %v224 = vunpack.c.h.b16 %v82
    %v225 = vunpack.c.l.b16 %v83
    %v226 = vunpack.c.h.b16 %v83
    %v227 = vunpack.c.l.b16 %v84
    %v228 = vunpack.c.h.b16 %v84
    %v229 = vpack.c.b16 %v221, %v221
    %v230 = vpack.c.b16 %v222, %v222
    %v231 = vpack.c.b16 %v223, %v223
    %v232 = vpack.c.b16 %v224, %v224
    %v233 = vpack.c.b16 %v225, %v225
    %v234 = vpack.c.b16 %v226, %v226
    %v235 = vpack.c.b16 %v227, %v227
    %v236 = vpack.c.b16 %v228, %v228
    %v369 = vunpack.c.l.b16 %v85
    %v370 = vunpack.c.l.b16 %v86
    %v371 = vunpack.c.l.b16 %v87
    %v372 = vunpack.c.l.b16 %v88
    %v373 = vunpack.c.l.b16 %v89
    %v374 = vunpack.c.l.b16 %v90
    %v375 = vunpack.c.l.b16 %v91
    %v376 = vunpack.c.l.b16 %v92
    %v377 = vunpack.c.l.b16 %v93
    %v378 = vunpack.c.l.b16 %v94
    %v379 = vunpack.c.l.b16 %v95
    %v380 = vunpack.c.l.b16 %v96
    %v381 = vunpack.c.l.b16 %v97
    %v382 = vunpack.c.l.b16 %v98
    %v383 = vunpack.c.l.b16 %v99
    %v384 = vunpack.c.l.b16 %v100
    %v385 = vunpack.c.l.b16 %v101
    %v386 = vunpack.c.l.b16 %v102
    %v387 = vunpack.c.l.b16 %v103
    %v388 = vunpack.c.l.b16 %v104
    %v389 = vunpack.c.l.b16 %v105
    %v390 = vunpack.c.l.b16 %v106
    %v391 = vunpack.c.l.b16 %v107
    %v392 = vunpack.c.l.b16 %v108
    %v393 = vunpack.c.l.b16 %v109
    %v394 = vunpack.c.l.b16 %v110
    %v395 = vunpack.c.l.b16 %v111
    %v396 = vunpack.c.l.b16 %v112
    %v397 = vunpack.c.l.b16 %v113
    %v398 = vunpack.c.l.b16 %v114
    %v399 = vunpack.c.l.b16 %v115
    %v400 = vunpack.c.l.b16 %v116
    %v401 = vunpack.c.l.b16 %v117
    %v402 = vunpack.c.l.b16 %v118
    %v403 = vunpack.c.l.b16 %v119
    %v404 = vunpack.c.l.b16 %v120
    %v405 = vunpack.c.l.b16 %v121
    %v406 = vunpack.c.l.b16 %v122
    %v407 = vunpack.c.l.b16 %v123
    %v408 = vunpack.c.l.b16 %v124
    %v409 = vunpack.c.l.b16 %v125
    %v410 = vunpack.c.l.b16 %v126
    %v411 = vunpack.c.l.b16 %v127
    %v412 = vunpack.c.l.b16 %v128
    %v413 = vunpack.c.l.b16 %v129
    %v414 = vunpack.c.l.b16 %v130
    %v415 = vunpack.c.l.b16 %v131
    %v416 = vunpack.c.l.b16 %v132
    %v417 = vunpack.c.l.b16 %v133
    %v418 = vunpack.c.l.b16 %v134
    %v419 = vunpack.c.l.b16 %v135
    %v420 = vunpack.c.l.b16 %v136
    %v421 = vunpack.c.l.b16 %v137
    %v422 = vunpack.c.l.b16 %v138
    %v423 = vunpack.c.l.b16 %v139
    %v424 = vunpack.c.l.b16 %v140
    %v425 = vunpack.c.l.b16 %v141
    %v426 = vunpack.c.l.b16 %v142
    %v427 = vunpack.c.l.b16 %v143
    %v428 = vunpack.c.l.b16 %v144
    %v429 = vunpack.c.l.b16 %v145
    %v430 = vunpack.c.l.b16 %v146
    %v431 = vunpack.c.l.b16 %v147
    %v432 = vunpack.c.l.b16 %v148
    %v433 = vunpack.c.l.b16 %v149
    %v434 = vunpack.c.l.b16 %v150
    %v435 = vunpack.c.l.b16 %v151
    %v436 = vunpack.c.l.b16 %v152
    %v437 = vunpack.c.l.b16 %v153
    %v438 = vunpack.c.l.b16 %v154
    %v439 = vunpack.c.l.b16 %v155
    %v440 = vunpack.c.l.b16 %v156
    %v441 = vunpack.c.l.b16 %v157
    %v442 = vunpack.c.l.b16 %v158
    %v443 = vunpack.c.l.b16 %v159
    %v444 = vunpack.c.l.b16 %v160
    %v445 = vunpack.c.l.b16 %v161
    %v446 = vunpack.c.l.b16 %v162
    %v447 = vunpack.c.l.b16 %v163
    %v448 = vunpack.c.l.b16 %v164
    %v449 = vunpack.c.l.b16 %v165
    %v450 = vunpack.c.l.b16 %v166
    %v451 = vunpack.c.l.b16 %v167
    %v452 = vunpack.c.l.b16 %v168
    %v453 = vunpack.c.l.b16 %v169
    %v454 = vunpack.c.l.b16 %v170
    %v455 = vunpack.c.l.b16 %v171
    %v456 = vunpack.c.l.b16 %v172
    %v457 = vunpack.c.l.b16 %v173
    %v458 = vunpack.c.l.b16 %v174
    %v459 = vunpack.c.l.b16 %v175
    %v460 = vunpack.c.l.b16 %v176
    %v461 = vunpack.c.l.b16 %v177
    %v462 = vunpack.c.l.b16 %v178
    %v463 = vunpack.c.l.b16 %v179
    %v464 = vunpack.c.l.b16 %v180
    %v465 = vunpack.c.l.b16 %v181
    %v466 = vunpack.c.l.b16 %v182
    %v467 = vunpack.c.l.b16 %v183
    %v468 = vunpack.c.l.b16 %v184
    %v469 = vunpack.c.l.b16 %v185
    %v470 = vunpack.c.l.b16 %v186
    %v471 = vunpack.c.l.b16 %v187
    %v472 = vunpack.c.l.b16 %v188
    %v473 = vunpack.c.l.b16 %v189
    %v474 = vunpack.c.l.b16 %v190
    %v475 = vunpack.c.l.b16 %v191
    %v476 = vunpack.c.l.b16 %v192
    %v477 = vunpack.c.l.b16 %v193
    %v478 = vunpack.c.l.b16 %v194
    %v479 = vunpack.c.l.b16 %v195
    %v480 = vunpack.c.l.b16 %v196
    %v481 = vunpack.c.l.b16 %v197
    %v482 = vunpack.c.l.b16 %v198
    %v483 = vunpack.c.l.b16 %v199
    %v484 = vunpack.c.l.b16 %v200
    %v485 = vunpack.c.l.b16 %v201
    %v486 = vunpack.c.l.b16 %v202
    %v487 = vunpack.c.l.b16 %v203
    %v488 = vunpack.c.l.b16 %v204
    %v489 = vunpack.c.l.b16 %v205
    %v490 = vunpack.c.l.b16 %v206
    %v491 = vunpack.c.l.b16 %v207
    %v492 = vunpack.c.l.b16 %v208
    %v493 = vunpack.c.l.b16 %v209
    %v494 = vpack.c.b16 %v370, %v369
    %v495 = vpack.c.b16 %v372, %v371
    %v496 = vpack.c.b16 %v374, %v373
    %v497 = vpack.c.b16 %v376, %v375
    %v498 = vpack.c.b16 %v378, %v377
    %v499 = vpack.c.b16 %v380, %v379
    %v500 = vpack.c.b16 %v382, %v381
    %v501 = vpack.c.b16 %v384, %v383
    %v502 = vpack.c.b16 %v386, %v385
    %v503 = vpack.c.b16 %v388, %v387
    %v504 = vpack.c.b16 %v390, %v389
    %v505 = vpack.c.b16 %v392, %v391
    %v506 = vpack.c.b16 %v394, %v393
    %v507 = vpack.c.b16 %v396, %v395
    %v508 = vpack.c.b16 %v398, %v397
    %v509 = vpack.c.b16 %v400, %v399
    %v510 = vpack.c.b16 %v402, %v401
    %v511 = vpack.c.b16 %v404, %v403
    %v512 = vpack.c.b16 %v406, %v405
    %v513 = vpack.c.b16 %v408, %v407
    %v514 = vpack.c.b16 %v410, %v409
    %v515 = vpack.c.b16 %v412, %v411
    %v516 = vpack.c.b16 %v414, %v413
    %v517 = vpack.c.b16 %v416, %v415
    %v518 = vpack.c.b16 %v418, %v417
    %v519 = vpack.c.b16 %v420, %v419
    %v520 = vpack.c.b16 %v422, %v421
    %v521 = vpack.c.b16 %v424, %v423
    %v522 = vpack.c.b16 %v426, %v425
    %v523 = vpack.c.b16 %v428, %v427
    %v524 = vpack.c.b16 %v430, %v429
    %v525 = vpack.c.b16 %v432, %v431
    %v526 = vpack.c.b16 %v434, %v433
    %v527 = vpack.c.b16 %v436, %v435
    %v528 = vpack.c.b16 %v438, %v437
    %v529 = vpack.c.b16 %v440, %v439
    %v530 = vpack.c.b16 %v442, %v441
    %v531 = vpack.c.b16 %v444, %v443
    %v532 = vpack.c.b16 %v446, %v445
    %v533 = vpack.c.b16 %v448, %v447
    %v534 = vpack.c.b16 %v450, %v449
    %v535 = vpack.c.b16 %v452, %v451
    %v536 = vpack.c.b16 %v454, %v453
    %v537 = vpack.c.b16 %v456, %v455
    %v538 = vpack.c.b16 %v458, %v457
    %v539 = vpack.c.b16 %v460, %v459
    %v540 = vpack.c.b16 %v462, %v461
    %v541 = vpack.c.b16 %v464, %v463
    %v542 = vpack.c.b16 %v466, %v465
    %v543 = vpack.c.b16 %v468, %v467
    %v544 = vpack.c.b16 %v470, %v469
    %v545 = vpack.c.b16 %v472, %v471
    %v546 = vpack.c.b16 %v474, %v473
    %v547 = vpack.c.b16 %v476, %v475
    %v548 = vpack.c.b16 %v478, %v477
    %v549 = vpack.c.b16 %v480, %v479
    %v550 = vpack.c.b16 %v482, %v481
    %v551 = vpack.c.b16 %v484, %v483
    %v552 = vpack.c.b16 %v486, %v485
    %v553 = vpack.c.b16 %v488, %v487
    %v554 = vpack.c.b16 %v490, %v489
    %v555 = vpack.c.b16 %v492, %v491
    %v556 = vpack.c.b16 %v493, %v493
    %vm619 = vcmask 850944
    %v621 = vsel %vm619, %v236, 0
    %vm623 = vcmask 1043456
    %v625 = vsel %vm623, %v556, 0
    %627 = vmatprep.subr.bf16.mxu0 0
    %628 = vmatpush1.bf16.msra.mxu0 %v494
    %629 = vmatprep.subr.bf16.mxu0 0
    %630 = vmatpush1.bf16.msra.mxu0 %v495
    %631 = vmatprep.subr.bf16.mxu0 0
    %632 = vmatpush1.bf16.msra.mxu0 %v496
    %633 = vmatprep.subr.bf16.mxu0 0
    %634 = vmatpush1.bf16.msra.mxu0 %v497
    %635 = vmatprep.subr.bf16.mxu0 0
    %636 = vmatpush1.bf16.msra.mxu0 %v498
    %637 = vmatprep.subr.bf16.mxu0 0
    %638 = vmatpush1.bf16.msra.mxu0 %v499
    %639 = vmatprep.subr.bf16.mxu0 0
    %640 = vmatpush1.bf16.msra.mxu0 %v500
    %641 = vmatprep.subr.bf16.mxu0 0
    %642 = vmatpush1.bf16.msra.mxu0 %v501
    %643 = vmatprep.subr.bf16.mxu0 0
    %644 = vmatpush1.bf16.msra.mxu0 %v502
    %645 = vmatprep.subr.bf16.mxu0 0
    %646 = vmatpush1.bf16.msra.mxu0 %v503
    %647 = vmatprep.subr.bf16.mxu0 0
    %648 = vmatpush1.bf16.msra.mxu0 %v504
    %649 = vmatprep.subr.bf16.mxu0 0
    %650 = vmatpush1.bf16.msra.mxu0 %v505
    %651 = vmatprep.subr.bf16.mxu0 0
    %652 = vmatpush1.bf16.msra.mxu0 %v506
    %653 = vmatprep.subr.bf16.mxu0 0
    %654 = vmatpush1.bf16.msra.mxu0 %v507
    %655 = vmatprep.subr.bf16.mxu0 0
    %656 = vmatpush1.bf16.msra.mxu0 %v508
    %657 = vmatprep.subr.bf16.mxu0 0
    %658 = vmatpush1.bf16.msra.mxu0 %v509
    %659 = vmatprep.mubr.bf16.mxu0 %v230
    %660 = vmatmul.mubr.bf16.gmra.mrb[0].mxu0 %v229
    %v661 = vpop.f32.mrb[0].mxu0
    %v662 = vadd.f32 %v215, %v661
    %v663 = vpop.f32.mrb[0].mxu0
    %v664 = vpop.f32.mrb[0].mxu0
    %v665 = vpop.f32.mrb[0].mxu0
    %666 = vdwg.mxu0
    %667 = vmatprep.subr.bf16.mxu0 0
    %668 = vmatpush1.bf16.msra.mxu0 %v510
    %669 = vmatprep.subr.bf16.mxu0 0
    %670 = vmatpush1.bf16.msra.mxu0 %v511
    %671 = vmatprep.subr.bf16.mxu0 0
    %672 = vmatpush1.bf16.msra.mxu0 %v512
    %673 = vmatprep.subr.bf16.mxu0 0
    %674 = vmatpush1.bf16.msra.mxu0 %v513
    %675 = vmatprep.subr.bf16.mxu0 0
    %676 = vmatpush1.bf16.msra.mxu0 %v514
    %677 = vmatprep.subr.bf16.mxu0 0
    %678 = vmatpush1.bf16.msra.mxu0 %v515
    %679 = vmatprep.subr.bf16.mxu0 0
    %680 = vmatpush1.bf16.msra.mxu0 %v516
    %681 = vmatprep.subr.bf16.mxu0 0
    %682 = vmatpush1.bf16.msra.mxu0 %v517
    %683 = vmatprep.subr.bf16.mxu0 0
    %684 = vmatpush1.bf16.msra.mxu0 %v518
    %685 = vmatprep.subr.bf16.mxu0 0
    %686 = vmatpush1.bf16.msra.mxu0 %v519
    %687 = vmatprep.subr.bf16.mxu0 0
    %688 = vmatpush1.bf16.msra.mxu0 %v520
    %689 = vmatprep.subr.bf16.mxu0 0
    %690 = vmatpush1.bf16.msra.mxu0 %v521
    %691 = vmatprep.subr.bf16.mxu0 0
    %692 = vmatpush1.bf16.msra.mxu0 %v522
    %693 = vmatprep.subr.bf16.mxu0 0
    %694 = vmatpush1.bf16.msra.mxu0 %v523
    %695 = vmatprep.subr.bf16.mxu0 0
    %696 = vmatpush1.bf16.msra.mxu0 %v524
    %697 = vmatprep.subr.bf16.mxu0 0
    %698 = vmatpush1.bf16.msra.mxu0 %v525
    %699 = vmatprep.mubr.bf16.mxu0 %v232
    %700 = vmatmul.mubr.bf16.gmra.mrb[0].mxu0 %v231
    %v701 = vpop.f32.mrb[0].mxu0
    %v702 = vadd.f32 %v662, %v701
    %v703 = vpop.f32.mrb[0].mxu0
    %v704 = vpop.f32.mrb[0].mxu0
    %v705 = vpop.f32.mrb[0].mxu0
    %706 = vdwg.mxu0
    %707 = vmatprep.subr.bf16.mxu0 0
    %708 = vmatpush1.bf16.msra.mxu0 %v526
    %709 = vmatprep.subr.bf16.mxu0 0
    %710 = vmatpush1.bf16.msra.mxu0 %v527
    %711 = vmatprep.subr.bf16.mxu0 0
    %712 = vmatpush1.bf16.msra.mxu0 %v528
    %713 = vmatprep.subr.bf16.mxu0 0
    %714 = vmatpush1.bf16.msra.mxu0 %v529
    %715 = vmatprep.subr.bf16.mxu0 0
    %716 = vmatpush1.bf16.msra.mxu0 %v530
    %717 = vmatprep.subr.bf16.mxu0 0
    %718 = vmatpush1.bf16.msra.mxu0 %v531
    %719 = vmatprep.subr.bf16.mxu0 0
    %720 = vmatpush1.bf16.msra.mxu0 %v532
    %721 = vmatprep.subr.bf16.mxu0 0
    %722 = vmatpush1.bf16.msra.mxu0 %v533
    %723 = vmatprep.subr.bf16.mxu0 0
    %724 = vmatpush1.bf16.msra.mxu0 %v534
    %725 = vmatprep.subr.bf16.mxu0 0
    %726 = vmatpush1.bf16.msra.mxu0 %v535
    %727 = vmatprep.subr.bf16.mxu0 0
    %728 = vmatpush1.bf16.msra.mxu0 %v536
    %729 = vmatprep.subr.bf16.mxu0 0
    %730 = vmatpush1.bf16.msra.mxu0 %v537
    %731 = vmatprep.subr.bf16.mxu0 0
    %732 = vmatpush1.bf16.msra.mxu0 %v538
    %733 = vmatprep.subr.bf16.mxu0 0
    %734 = vmatpush1.bf16.msra.mxu0 %v539
    %735 = vmatprep.subr.bf16.mxu0 0
    %736 = vmatpush1.bf16.msra.mxu0 %v540
    %737 = vmatprep.subr.bf16.mxu0 0
    %738 = vmatpush1.bf16.msra.mxu0 %v541
    %739 = vmatprep.mubr.bf16.mxu0 %v234
    %740 = vmatmul.mubr.bf16.gmra.mrb[0].mxu0 %v233
    %v741 = vpop.f32.mrb[0].mxu0
    %v742 = vadd.f32 %v702, %v741
    %v743 = vpop.f32.mrb[0].mxu0
    %v744 = vpop.f32.mrb[0].mxu0
    %v745 = vpop.f32.mrb[0].mxu0
    %746 = vdwg.mxu0
    %747 = vmatprep.subr.bf16.mxu0 0
    %748 = vmatpush1.bf16.msra.mxu0 %v542
    %749 = vmatprep.subr.bf16.mxu0 0
    %750 = vmatpush1.bf16.msra.mxu0 %v543
    %751 = vmatprep.subr.bf16.mxu0 0
    %752 = vmatpush1.bf16.msra.mxu0 %v544
    %753 = vmatprep.subr.bf16.mxu0 0
    %754 = vmatpush1.bf16.msra.mxu0 %v545
    %755 = vmatprep.subr.bf16.mxu0 0
    %756 = vmatpush1.bf16.msra.mxu0 %v546
    %757 = vmatprep.subr.bf16.mxu0 0
    %758 = vmatpush1.bf16.msra.mxu0 %v547
    %759 = vmatprep.subr.bf16.mxu0 0
    %760 = vmatpush1.bf16.msra.mxu0 %v548
    %761 = vmatprep.subr.bf16.mxu0 0
    %762 = vmatpush1.bf16.msra.mxu0 %v549
    %763 = vmatprep.subr.bf16.mxu0 0
    %764 = vmatpush1.bf16.msra.mxu0 %v550
    %765 = vmatprep.subr.bf16.mxu0 0
    %766 = vmatpush1.bf16.msra.mxu0 %v551
    %767 = vmatprep.subr.bf16.mxu0 0
    %768 = vmatpush1.bf16.msra.mxu0 %v552
    %769 = vmatprep.subr.bf16.mxu0 0
    %770 = vmatpush1.bf16.msra.mxu0 %v553
    %771 = vmatprep.subr.bf16.mxu0 0
    %772 = vmatpush1.bf16.msra.mxu0 %v554
    %773 = vmatprep.subr.bf16.mxu0 0
    %774 = vmatpush1.bf16.msra.mxu0 %v555
    %775 = vmatprep.subr.bf16.mxu0 0
    %776 = vmatpush1.bf16.msra.mxu0 %v625
    %777 = vmatprep.subr.bf16.mxu0 0
    %778 = vmatpush1.bf16.msra.mxu0 0
    %779 = vmatprep.mubr.bf16.mxu0 %v621
    %780 = vmatmul.mubr.bf16.gmra.mrb[0].mxu0 %v235
    %v781 = vpop.f32.mrb[0].mxu0
    %v782 = vadd.f32 %v742, %v781
    %v783 = vpop.f32.mrb[0].mxu0
    %v784 = vpop.f32.mrb[0].mxu0
    %v785 = vpop.f32.mrb[0].mxu0
    %786 = vdwg.mxu0
    %vm787 = vcmp.gt.f32.partialorder %v782, 0.0
    %v788 = vmul.f32 %v782, 0.01
    %v789 = vsel %vm787, %v782, %v788
    %v790 = vpack.c.bf16 %v789, %v789
    %v791 = vld [vmem:[#allocation7] sm:$0xf]
    %v792 = vld [vmem:[#allocation7 + $0x4] sm:$0xf]
    %v793 = vld [vmem:[#allocation7 + $0x8] sm:$0xf]
    %v794 = vld [vmem:[#allocation7 + $0xc] sm:$0xf]
    %v795 = vld [vmem:[#allocation7 + $0x10] sm:$0xf]
    %v796 = vld [vmem:[#allocation7 + $0x14] sm:$0xf]
    %v797 = vld [vmem:[#allocation7 + $0x18] sm:$0xf]
    %v798 = vld [vmem:[#allocation7 + $0x1c] sm:$0xf]
    %v799 = vld [vmem:[#allocation7 + $0x20] sm:$0xf]
    %v800 = vld [vmem:[#allocation7 + $0x24] sm:$0xf]
    %v801 = vld [vmem:[#allocation7 + $0x28] sm:$0xf]
    %v802 = vld [vmem:[#allocation7 + $0x2c] sm:$0xf]
    %v803 = vld [vmem:[#allocation7 + $0x30] sm:$0xf]
    %v804 = vld [vmem:[#allocation7 + $0x34] sm:$0xf]
    %v805 = vld [vmem:[#allocation7 + $0x38] sm:$0xf]
    %v806 = vld [vmem:[#allocation7 + $0x3c] sm:$0xf]
    %v807 = vld [vmem:[%s4] sm:$0x1]
    %v809 = vlaneseq
    %v810 = vshrl.u32 %v809, 7
    %v811 = vsub.s32 0, %v810
    %v812 = vrot.slane %v807, %v811
    %v830 = vunpack.c.l.b16 %v791
    %v831 = vunpack.c.l.b16 %v792
    %v832 = vunpack.c.l.b16 %v793
    %v833 = vunpack.c.l.b16 %v794
    %v834 = vunpack.c.l.b16 %v795
    %v835 = vunpack.c.l.b16 %v796
    %v836 = vunpack.c.l.b16 %v797
    %v837 = vunpack.c.l.b16 %v798
    %v838 = vunpack.c.l.b16 %v799
    %v839 = vunpack.c.l.b16 %v800
    %v840 = vunpack.c.l.b16 %v801
    %v841 = vunpack.c.l.b16 %v802
    %v842 = vunpack.c.l.b16 %v803
    %v843 = vunpack.c.l.b16 %v804
    %v844 = vunpack.c.l.b16 %v805
    %v845 = vunpack.c.l.b16 %v806
    %v846 = vpack.c.b16 %v831, %v830
    %v847 = vpack.c.b16 %v833, %v832
    %v848 = vpack.c.b16 %v835, %v834
    %v849 = vpack.c.b16 %v837, %v836
    %v850 = vpack.c.b16 %v839, %v838
    %v851 = vpack.c.b16 %v841, %v840
    %v852 = vpack.c.b16 %v843, %v842
    %v853 = vpack.c.b16 %v845, %v844
    %862 = vmatprep.subr.bf16.mxu0 0
    %863 = vmatpush1.bf16.msra.mxu0 %v846
    %864 = vmatprep.subr.bf16.mxu0 0
    %865 = vmatpush1.bf16.msra.mxu0 %v847
    %866 = vmatprep.subr.bf16.mxu0 0
    %867 = vmatpush1.bf16.msra.mxu0 %v848
    %868 = vmatprep.subr.bf16.mxu0 0
    %869 = vmatpush1.bf16.msra.mxu0 %v849
    %870 = vmatprep.subr.bf16.mxu0 0
    %871 = vmatpush1.bf16.msra.mxu0 %v850
    %872 = vmatprep.subr.bf16.mxu0 0
    %873 = vmatpush1.bf16.msra.mxu0 %v851
    %874 = vmatprep.subr.bf16.mxu0 0
    %875 = vmatpush1.bf16.msra.mxu0 %v852
    %876 = vmatprep.subr.bf16.mxu0 0
    %877 = vmatpush1.bf16.msra.mxu0 %v853
    %878 = vmatprep.subr.bf16.mxu0 0
    %879 = vmatpush1.bf16.msra.mxu0 0
    %880 = vmatprep.subr.bf16.mxu0 0
    %881 = vmatpush1.bf16.msra.mxu0 0
    %882 = vmatprep.subr.bf16.mxu0 0
    %883 = vmatpush1.bf16.msra.mxu0 0
    %884 = vmatprep.subr.bf16.mxu0 0
    %885 = vmatpush1.bf16.msra.mxu0 0
    %886 = vmatprep.subr.bf16.mxu0 0
    %887 = vmatpush1.bf16.msra.mxu0 0
    %888 = vmatprep.subr.bf16.mxu0 0
    %889 = vmatpush1.bf16.msra.mxu0 0
    %890 = vmatprep.subr.bf16.mxu0 0
    %891 = vmatpush1.bf16.msra.mxu0 0
    %892 = vmatprep.subr.bf16.mxu0 0
    %893 = vmatpush1.bf16.msra.mxu0 0
    %894 = vmatprep.mubr.bf16.mxu0 0
    %895 = vmatmul.mubr.bf16.gmra.mrb[0].mxu0 %v790
    %v896 = vpop.f32.mrb[0].mxu0
    %v897 = vadd.f32 %v812, %v896
    %v898 = vpop.f32.mrb[0].mxu0
    %v899 = vpop.f32.mrb[0].mxu0
    %v900 = vpop.f32.mrb[0].mxu0
    %901 = vdwg.mxu0
    %vm902 = vcmp.gt.f32.partialorder %v897, 0.0
    %v903 = vmul.f32 %v897, 0.01
    %v904 = vsel %vm902, %v897, %v903
    %v905 = vpack.c.bf16 %v904, %v904
    %v906 = vld [vmem:[#allocation8] sm:$0xf]
    %v907 = vld [vmem:[#allocation8 + $0x4] sm:$0xf]
    %v908 = vld [vmem:[#allocation8 + $0x8] sm:$0xf]
    %v909 = vld [vmem:[#allocation8 + $0xc] sm:$0xf]
    %v910 = vld [vmem:[#allocation8 + $0x10] sm:$0xf]
    %v911 = vld [vmem:[#allocation8 + $0x14] sm:$0xf]
    %v912 = vld [vmem:[#allocation8 + $0x18] sm:$0xf]
    %v913 = vld [vmem:[#allocation8 + $0x1c] sm:$0xf]
    %v914 = vld [vmem:[#allocation8 + $0x20] sm:$0xf]
    %v915 = vld [vmem:[#allocation8 + $0x24] sm:$0xf]
    %v916 = vld [vmem:[#allocation8 + $0x28] sm:$0xf]
    %v917 = vld [vmem:[#allocation8 + $0x2c] sm:$0xf]
    %v918 = vld [vmem:[#allocation8 + $0x30] sm:$0xf]
    %v919 = vld [vmem:[#allocation8 + $0x34] sm:$0xf]
    %v920 = vld [vmem:[#allocation8 + $0x38] sm:$0xf]
    %v921 = vld [vmem:[#allocation8 + $0x3c] sm:$0xf]
    %v922 = vld [vmem:[%s6] sm:$0x1]
    %v924 = vlaneseq
    %v925 = vshrl.u32 %v924, 7
    %v926 = vsub.s32 0, %v925
    %v927 = vrot.slane %v922, %v926
    %v945 = vunpack.c.l.b16 %v906
    %v946 = vunpack.c.l.b16 %v907
    %v947 = vunpack.c.l.b16 %v908
    %v948 = vunpack.c.l.b16 %v909
    %v949 = vunpack.c.l.b16 %v910
    %v950 = vunpack.c.l.b16 %v911
    %v951 = vunpack.c.l.b16 %v912
    %v952 = vunpack.c.l.b16 %v913
    %v953 = vunpack.c.l.b16 %v914
    %v954 = vunpack.c.l.b16 %v915
    %v955 = vunpack.c.l.b16 %v916
    %v956 = vunpack.c.l.b16 %v917
    %v957 = vunpack.c.l.b16 %v918
    %v958 = vunpack.c.l.b16 %v919
    %v959 = vunpack.c.l.b16 %v920
    %v960 = vunpack.c.l.b16 %v921
    %v961 = vpack.c.b16 %v946, %v945
    %v962 = vpack.c.b16 %v948, %v947
    %v963 = vpack.c.b16 %v950, %v949
    %v964 = vpack.c.b16 %v952, %v951
    %v965 = vpack.c.b16 %v954, %v953
    %v966 = vpack.c.b16 %v956, %v955
    %v967 = vpack.c.b16 %v958, %v957
    %v968 = vpack.c.b16 %v960, %v959
    %977 = vmatprep.subr.bf16.mxu0 0
    %978 = vmatpush1.bf16.msra.mxu0 %v961
    %979 = vmatprep.subr.bf16.mxu0 0
    %980 = vmatpush1.bf16.msra.mxu0 %v962
    %981 = vmatprep.subr.bf16.mxu0 0
    %982 = vmatpush1.bf16.msra.mxu0 %v963
    %983 = vmatprep.subr.bf16.mxu0 0
    %984 = vmatpush1.bf16.msra.mxu0 %v964
    %985 = vmatprep.subr.bf16.mxu0 0
    %986 = vmatpush1.bf16.msra.mxu0 %v965
    %987 = vmatprep.subr.bf16.mxu0 0
    %988 = vmatpush1.bf16.msra.mxu0 %v966
    %989 = vmatprep.subr.bf16.mxu0 0
    %990 = vmatpush1.bf16.msra.mxu0 %v967
    %991 = vmatprep.subr.bf16.mxu0 0
    %992 = vmatpush1.bf16.msra.mxu0 %v968
    %993 = vmatprep.subr.bf16.mxu0 0
    %994 = vmatpush1.bf16.msra.mxu0 0
    %995 = vmatprep.subr.bf16.mxu0 0
    %996 = vmatpush1.bf16.msra.mxu0 0
    %997 = vmatprep.subr.bf16.mxu0 0
    %998 = vmatpush1.bf16.msra.mxu0 0
    %999 = vmatprep.subr.bf16.mxu0 0
    %1000 = vmatpush1.bf16.msra.mxu0 0
    %1001 = vmatprep.subr.bf16.mxu0 0
    %1002 = vmatpush1.bf16.msra.mxu0 0
    %1003 = vmatprep.subr.bf16.mxu0 0
    %1004 = vmatpush1.bf16.msra.mxu0 0
    %1005 = vmatprep.subr.bf16.mxu0 0
    %1006 = vmatpush1.bf16.msra.mxu0 0
    %1007 = vmatprep.subr.bf16.mxu0 0
    %1008 = vmatpush1.bf16.msra.mxu0 0
    %1009 = vmatprep.mubr.bf16.mxu0 0
    %1010 = vmatmul.mubr.bf16.gmra.mrb[0].mxu0 %v905
    %v1011 = vpop.f32.mrb[0].mxu0
    %v1012 = vadd.f32 %v927, %v1011
    %v1013 = vpop.f32.mrb[0].mxu0
    %v1014 = vpop.f32.mrb[0].mxu0
    %v1015 = vpop.f32.mrb[0].mxu0
    %1016 = vdwg.mxu0
    %vm1017 = vcmp.gt.f32.partialorder %v1012, 0.0
    %v1018 = vmul.f32 %v1012, 0.01
    %v1019 = vsel %vm1017, %v1012, %v1018
    %v1020 = vxor.u32 %v1019, 2147483648
    %v1021 = vmul.f32 %v1020, 1.442695
    %v1022 = vpow.pop %v1021
    %v1023 = vadd.f32 %v1022, 1.0
    %v1024 = vrcp.pop %v1023
    %v1025 = vmul.f32 1.0, %v1024
    %1026 = vst [vmem:[#allocation10] sm:$0xff] %v1025
    // Predicated region
    $region46: #{tpu_custom_call.1} parent=1 // pred_check
      _
    $region47: #{tpu_custom_call.1} parent=1 // pred_check_branch
      %1028 = sbr.rel (0) target = $region49
    $region48: #{tpu_custom_call.1} parent=1 // pred_region
      %s1030 = ssub.s32 128, 128
      %1031 = vsyncadd [#allocation4], %s1030
      %s1033 = sshll.u32 [#allocation10], 4
      %s1034 = int_to_ptr.vmem [resolvable:$true] %s1033
      %1036 = dma.vmem_to_hbm [thread:$0]  %s1034, 128, %s7, [#allocation4]
    $region49: #{tpu_custom_call.1} parent=1 // pred_fallthru
      _
    // Predicated region
    $region50: #{tpu_custom_call.1} parent=1 // pred_check
      _
    $region51: #{tpu_custom_call.1} parent=1 // pred_check_branch
      %1038 = sbr.rel (0) target = $region53
    $region52: #{tpu_custom_call.1} parent=1 // pred_region
      %1039 = dma.done [#allocation4], 128
    $region53: #{tpu_custom_call.1} parent=1 // pred_fallthru
      _
    %1040 = vsyncpa [#allocation3], 1
    %1041 = vsyncpa [#allocation6], 1
    %1042 = vsyncpa [#allocation9], 1
    %1043 = vsyncpa [#allocation4], 1

</llo_original>
